<compile_context>
chip_gen: v7x
topology: tpu7x:2x2x1
jax: 0.10.0
libtpu: 0.0.40
codegen_flags: <defaults>
</compile_context>

<pallas_src>
import jax
import jax.numpy as jnp
from jax.experimental import pallas as pl
from jax.experimental.pallas import tpu as pltpu


def _round_up(x, m):
    return ((x + m - 1) // m) * m


def _cdiv(a, b):
    return (a + b - 1) // b


# ----------------------------------------------------------------------------
# Pallas kernel
# ----------------------------------------------------------------------------
def make_nfm_kernel(num_hidden):
    """Fused NFM kernel; batch lives on the lane axis of every operand."""

    def kernel(*refs):
        ssq_ref, lin_ref = refs[0], refs[1]
        out_ref = refs[-1]
        params = refs[2:-1]                       # [W, b] * num_hidden + [wo, bo]

        # ---- FM cross term (reduce_sum=False); fields pre-reduced in glue ---
        s = ssq_ref[0]                            # (E, tile_B) f32
        sq = ssq_ref[1]                           # (E, tile_B) f32
        x = 0.5 * (s * s - sq)                    # keep f32 (cancellation-prone)
        # BatchNorm1d(embed_dim) + per-layer BatchNorms folded into Linears.
        # TODO(synk): Dropout(0.2) omitted — identity in inference mode.

        # ---- MLP: [Linear (BN folded) -> ReLU] * num_hidden -----------------
        idx = 0
        for _ in range(num_hidden):
            w_ref, b_ref = params[idx], params[idx + 1]
            idx += 2
            # bf16 inputs, f32 accumulation -> single MXU pass on v6e/v7x.
            x = jnp.dot(w_ref[...], x.astype(w_ref.dtype),
                        preferred_element_type=jnp.float32)
            x = jnp.maximum(x + b_ref[...], 0.0)  # (d_out, tile_B) f32

        # ---- Output Linear(d_last, 1): VPU multiply + sublane reduce --------
        wo_ref, bo_ref = params[idx], params[idx + 1]
        mlp = jnp.sum(x * wo_ref[...], axis=0, keepdims=True) + bo_ref[...]

        # ---- FeaturesLinear (precomputed, lane-dense) + sigmoid -------------
        out_ref[...] = jax.nn.sigmoid(lin_ref[...] + mlp)     # (1, tile_B)

    return kernel


def nfm_forward_pallas(ssq, lin_row, folded_params, *, block_b=8192):
    """Run the fused NFM kernel.

    ssq:           (2, E, B) f32: [sum_f e_f, sum_f e_f^2], batch on lanes.
    lin_row:       (1, B) f32 FeaturesLinear term (already reduced over fields).
    folded_params: [W1,b1, ..., Wo,bo] with BN folded; Wi is (d_out, d_in) bf16,
                   bi is (d_out, 1) f32, Wo is (d_last, 1) f32, bo is (1, 1) f32.
    Returns (B,) sigmoid scores.
    """
    _, E, B = ssq.shape
    num_hidden = (len(folded_params) - 2) // 2

    # Tile selection: bound padding to <128 lanes per tile, and keep >=2 tiles
    # (when B allows) so v7x megacore sharding actually engages.
    n_tiles = _cdiv(B, block_b)
    if B >= 256:
        n_tiles = max(n_tiles, 2)
    tile_b = _round_up(_cdiv(B, n_tiles), 128)
    Bp = n_tiles * tile_b
    if Bp != B:
        ssq = jnp.pad(ssq, ((0, 0), (0, 0), (0, Bp - B)))
        lin_row = jnp.pad(lin_row, ((0, 0), (0, Bp - B)))

    kernel = make_nfm_kernel(num_hidden)
    # Weights are small and get a constant block index -> stay resident in VMEM.
    weight_specs = [pl.BlockSpec(p.shape, lambda i: (0, 0)) for p in folded_params]
    grid_spec = pltpu.PrefetchScalarGridSpec(
        num_scalar_prefetch=0,
        grid=(n_tiles,),
        in_specs=[
            # Streamed per batch tile.  (If xprof ever shows this DMA exposed,
            # add pipeline_mode=pl.Buffered(3) here.)
            pl.BlockSpec((2, E, tile_b), lambda i: (0, 0, i)),
            pl.BlockSpec((1, tile_b), lambda i: (0, i)),
        ] + weight_specs,                                        # resident
        out_specs=pl.BlockSpec((1, tile_b), lambda i: (0, i)),
    )
    out = pl.pallas_call(
        kernel,
        out_shape=jax.ShapeDtypeStruct((1, Bp), jnp.float32),
        grid_spec=grid_spec,
        compiler_params=pltpu.CompilerParams(
            dimension_semantics=("parallel",),
            vmem_limit_bytes=32 * 1024 * 1024),
    )(ssq, lin_row, *folded_params)
    return out[0, :B]


# ----------------------------------------------------------------------------
# Parameter prep: fold eval-mode BatchNorms into the Linear layers
# ----------------------------------------------------------------------------
def fold_batchnorms(bn1_scale, bn1_shift, layer_params, weight_dtype=jnp.bfloat16):
    """Fold BN affine transforms into adjacent Linears; weights transposed to
    (d_out, d_in) (batch-on-lanes) form and cast to `weight_dtype`."""
    num_hidden = (len(layer_params) - 2) // 4
    in_scale = bn1_scale[0]                       # (E,)  BN right after the FM
    in_shift = bn1_shift[0]
    folded = []
    i = 0
    for _ in range(num_hidden):
        w, b, sc, sh = layer_params[i:i + 4]
        i += 4
        b, sc, sh = b[0], sc[0], sh[0]
        wf = in_scale[:, None] * w                # fold input-side affine
        bf = b + in_shift @ w
        wf = wf * sc[None, :]                     # fold this layer's BN
        bf = bf * sc + sh
        folded += [wf.T.astype(weight_dtype),     # (d_out, d_in)
                   bf[:, None].astype(jnp.float32)]
        in_scale = jnp.ones((w.shape[1],), jnp.float32)
        in_shift = jnp.zeros((w.shape[1],), jnp.float32)
    wo, bo = layer_params[i], layer_params[i + 1]
    folded += [jnp.asarray(wo, jnp.float32),      # (d_last, 1) — VPU path, keep f32
               jnp.asarray(bo, jnp.float32)]      # (1, 1)
    return folded


# ----------------------------------------------------------------------------
# Pure-JAX reference (original, unfolded semantics) for correctness check
# ----------------------------------------------------------------------------
def nfm_reference(emb, lin_row, bn1_scale, bn1_shift, layer_params):
    emb = emb.astype(jnp.float32)
    s = emb.sum(axis=1)
    sq = (emb * emb).sum(axis=1)
    x = 0.5 * (s * s - sq)
    x = x * bn1_scale + bn1_shift
    num_hidden = (len(layer_params) - 2) // 4
    i = 0
    for _ in range(num_hidden):
        w, b, sc, sh = layer_params[i:i + 4]
        i += 4
        x = jnp.maximum((x @ w + b) * sc + sh, 0.0)
    wo, bo = layer_params[i], layer_params[i + 1]
    mlp = x @ wo + bo                             # (B, 1)
    return jax.nn.sigmoid(lin_row[0][:, None] + mlp)[:, 0]


# ----------------------------------------------------------------------------
# Embedding-gather glue (pure JAX — fuses with the kernel under jit)
# ----------------------------------------------------------------------------
def field_offsets(dims):
    offs = [0]
    for d in dims[:-1]:
        offs.append(offs[-1] + d)
    return jnp.asarray(offs, jnp.int32)


def gather_embeddings(params, user_item, user_cat, item_cat,
                      uf_field_dims, if_field_dims):
    user = user_item[:, 0:1]
    item = user_item[:, 1:2]
    user_emb = params["u_table"][user]                          # (B, 1, E)
    item_emb = params["i_table"][item]                          # (B, 1, E)
    uf_emb = params["uf_table"][user_cat + field_offsets(uf_field_dims)[None, :]]
    if_emb = params["if_table"][item_cat + field_offsets(if_field_dims)[None, :]]
    emb = jnp.concatenate([user_emb, item_emb, uf_emb, if_emb], axis=1)  # (B,F,E)
    all_feature = jnp.concatenate([user, item, user_cat, item_cat], axis=1)
    return emb.astype(jnp.float32), all_feature


def features_linear(params, all_feature, field_dims):
    lin_off = field_offsets(field_dims)[None, :]
    linw = params["lin_table"][all_feature + lin_off][..., 0]            # (B, F)
    return (linw.sum(axis=1) + params["lin_bias"][0, 0])[None, :]        # (1, B)


def nfm_forward(params, folded_params, user_item, user_cat, item_cat,
                field_dims, uf_field_dims, if_field_dims, block_b=8192):
    """Full forward; intended to be called under a single jax.jit so the
    gather, field reduction, transpose, pad and kernel all fuse."""
    emb, all_feature = gather_embeddings(params, user_item, user_cat, item_cat,
                                         uf_field_dims, if_field_dims)
    # Field pre-reduction for the FM cross term: kernel streams only 2*E f32
    # per sample instead of F*E.  Keep f32 for the downstream s^2 - sq.
    s = jnp.sum(emb, axis=1)                          # (B, E)
    sq = jnp.sum(emb * emb, axis=1)                   # (B, E)
    ssq = jnp.stack([s.T, sq.T], axis=0)              # (2, E, B), batch on lanes
    lin_row = features_linear(params, all_feature, field_dims).astype(jnp.float32)
    return nfm_forward_pallas(ssq, lin_row, folded_params, block_b=block_b)


# ----------------------------------------------------------------------------
# Parameter construction
# ----------------------------------------------------------------------------
def bn_fold(gamma, beta, mean, var, eps=1e-5):
    scale = gamma / jnp.sqrt(var + eps)
    shift = beta - mean * scale
    return scale[None, :], shift[None, :]


def init_nfm_params(key, field_dims, ui_field_dims, uf_field_dims,
                    if_field_dims, embed_dim, mlp_dims):
    ks = list(jax.random.split(key, 32))
    kit = iter(ks)

    def nrm(shape, s=0.1):
        return s * jax.random.normal(next(kit), shape, dtype=jnp.float32)

    p = {}
    p["u_table"] = nrm((ui_field_dims[0], embed_dim))
    p["i_table"] = nrm((ui_field_dims[1], embed_dim))
    p["uf_table"] = nrm((sum(uf_field_dims), embed_dim))
    p["if_table"] = nrm((sum(if_field_dims), embed_dim))
    p["lin_table"] = nrm((sum(field_dims), 1))
    p["lin_bias"] = nrm((1, 1))

    g = 1.0 + nrm((embed_dim,))
    b = nrm((embed_dim,))
    m = nrm((embed_dim,))
    v = 0.5 + jnp.abs(nrm((embed_dim,)))
    p["bn1_scale"], p["bn1_shift"] = bn_fold(g, b, m, v)

    layer_params = []
    d_in = embed_dim
    for d_out in mlp_dims:
        w = nrm((d_in, d_out))
        bb = nrm((1, d_out))
        g = 1.0 + nrm((d_out,))
        be = nrm((d_out,))
        mu = nrm((d_out,))
        va = 0.5 + jnp.abs(nrm((d_out,)))
        sc, sh = bn_fold(g, be, mu, va)
        layer_params += [w, bb, sc, sh]
        d_in = d_out
    layer_params += [nrm((d_in, 1)), nrm((1, 1))]   # output Linear(d_in, 1)
    p["mlp_layers"] = layer_params
    return p


# ----------------------------------------------------------------------------
# main
# ----------------------------------------------------------------------------
if __name__ == "__main__":
    B = 8
    embed_dim = 32
    mlp_dims = (64, 32)
    ui_field_dims = [10, 12]            # [num_users, num_items]
    uf_field_dims = [5, 7]              # user categorical fields
    if_field_dims = [3, 4, 6]           # item categorical fields
    field_dims = ui_field_dims + uf_field_dims + if_field_dims   # 7 fields total

    key = jax.random.PRNGKey(0)
    kp, k1, k2, k3, k4, k5, k6, k7 = jax.random.split(key, 8)

    params = init_nfm_params(kp, field_dims, ui_field_dims, uf_field_dims,
                             if_field_dims, embed_dim, mlp_dims)

    user_item = jnp.stack(
        [jax.random.randint(k1, (B,), 0, ui_field_dims[0], dtype=jnp.int32),
         jax.random.randint(k2, (B,), 0, ui_field_dims[1], dtype=jnp.int32)],
        axis=1)                                                 # (B, 2)
    user_cat = jnp.stack(
        [jax.random.randint(k3, (B,), 0, uf_field_dims[0], dtype=jnp.int32),
         jax.random.randint(k4, (B,), 0, uf_field_dims[1], dtype=jnp.int32)],
        axis=1)                                                 # (B, 2)
    item_cat = jnp.stack(
        [jax.random.randint(k5, (B,), 0, if_field_dims[0], dtype=jnp.int32),
         jax.random.randint(k6, (B,), 0, if_field_dims[1], dtype=jnp.int32),
         jax.random.randint(k7, (B,), 0, if_field_dims[2], dtype=jnp.int32)],
        axis=1)                                                 # (B, 3)

    folded = fold_batchnorms(params["bn1_scale"], params["bn1_shift"],
                             params["mlp_layers"])

    @jax.jit
    def fwd(p, fp, ui, uc, ic):
        return nfm_forward(p, fp, ui, uc, ic,
                           field_dims, uf_field_dims, if_field_dims)

    out = jax.block_until_ready(fwd(params, folded, user_item, user_cat, item_cat))

    # Reference (original unfolded f32 semantics).
    emb_ref, all_feature = gather_embeddings(params, user_item, user_cat,
                                             item_cat, uf_field_dims,
                                             if_field_dims)
    lin_ref = features_linear(params, all_feature, field_dims)
    ref = nfm_reference(emb_ref, lin_ref, params["bn1_scale"],
                        params["bn1_shift"], params["mlp_layers"])

    assert out.shape == (B,), out.shape
    # bf16 MLP weights in the kernel -> tolerance slightly relaxed vs pure-f32.
    assert jnp.allclose(out, ref, atol=2e-3, rtol=2e-3), (out, ref)

    print("KERNEL_OK")
</pallas_src>

<mosaic_0001>
module attributes {stable_mosaic.version = 11 : i64} {
  func.func @kernel(%arg0: i32, %arg1: memref<2x32x128xf32, #tpu.memory_space<vmem>>, %arg2: memref<1x128xf32, #tpu.memory_space<vmem>>, %arg3: memref<64x32xbf16, #tpu.memory_space<vmem>>, %arg4: memref<64x1xf32, #tpu.memory_space<vmem>>, %arg5: memref<32x64xbf16, #tpu.memory_space<vmem>>, %arg6: memref<32x1xf32, #tpu.memory_space<vmem>>, %arg7: memref<32x1xf32, #tpu.memory_space<vmem>>, %arg8: memref<1x1xf32, #tpu.memory_space<vmem>>, %arg9: memref<1x128xf32, #tpu.memory_space<vmem>>) attributes {dimension_semantics = [#tpu.dimension_semantics<parallel>], iteration_bounds = array<i64: 1>, scalar_prefetch = 0 : i64, scratch_operands = 0 : i64, tpu.core_type = #tpu.core_type<tc>, window_params = [{transform_indices = @transform_0, window_bounds = array<i64: 2, 32, 128>}, {transform_indices = @transform_1, window_bounds = array<i64: 1, 128>}, {pipeline_mode = #tpu.pipeline_mode<synchronous>, transform_indices = @transform_2, window_bounds = array<i64: 64, 32>}, {pipeline_mode = #tpu.pipeline_mode<synchronous>, transform_indices = @transform_3, window_bounds = array<i64: 64, 1>}, {pipeline_mode = #tpu.pipeline_mode<synchronous>, transform_indices = @transform_4, window_bounds = array<i64: 32, 64>}, {pipeline_mode = #tpu.pipeline_mode<synchronous>, transform_indices = @transform_5, window_bounds = array<i64: 32, 1>}, {pipeline_mode = #tpu.pipeline_mode<synchronous>, transform_indices = @transform_6, window_bounds = array<i64: 32, 1>}, {pipeline_mode = #tpu.pipeline_mode<synchronous>, transform_indices = @transform_7, window_bounds = array<i64: 1, 1>}, {transform_indices = @transform_8, window_bounds = array<i64: 1, 128>}]} {
    %c0 = arith.constant 0 : index
    %c0_0 = arith.constant 0 : index
    %c0_1 = arith.constant 0 : index
    %0 = vector.load %arg1[%c0, %c0_0, %c0_1] : memref<2x32x128xf32, #tpu.memory_space<vmem>>, vector<1x32x128xf32>
    %1 = vector.shape_cast %0 : vector<1x32x128xf32> to vector<32x128xf32>
    %c1 = arith.constant 1 : index
    %c0_2 = arith.constant 0 : index
    %c0_3 = arith.constant 0 : index
    %2 = vector.load %arg1[%c1, %c0_2, %c0_3] : memref<2x32x128xf32, #tpu.memory_space<vmem>>, vector<1x32x128xf32>
    %3 = vector.shape_cast %2 : vector<1x32x128xf32> to vector<32x128xf32>
    %4 = arith.mulf %1, %1 : vector<32x128xf32>
    %5 = arith.subf %4, %3 : vector<32x128xf32>
    %cst = arith.constant 5.000000e-01 : f32
    %6 = vector.broadcast %cst : f32 to vector<32x128xf32>
    %7 = arith.mulf %6, %5 : vector<32x128xf32>
    %c0_4 = arith.constant 0 : index
    %c0_5 = arith.constant 0 : index
    %8 = vector.load %arg3[%c0_4, %c0_5] : memref<64x32xbf16, #tpu.memory_space<vmem>>, vector<64x32xbf16>
    %9 = arith.truncf %7 : vector<32x128xf32> to vector<32x128xbf16>
    %cst_6 = arith.constant dense<0.000000e+00> : vector<64x128xf32>
    %10 = tpu.matmul %8, %9, %cst_6 {dimension_numbers = #tpu.dot_dimension_numbers<[1], [0], [0], [1], [0, 0, 1, 1], [], []>} : vector<64x32xbf16>, vector<32x128xbf16>, vector<64x128xf32> -> vector<64x128xf32>
    %c0_7 = arith.constant 0 : index
    %c0_8 = arith.constant 0 : index
    %11 = vector.load %arg4[%c0_7, %c0_8] : memref<64x1xf32, #tpu.memory_space<vmem>>, vector<64x1xf32>
    %12 = vector.broadcast %11 : vector<64x1xf32> to vector<64x128xf32>
    %13 = arith.addf %10, %12 : vector<64x128xf32>
    %cst_9 = arith.constant 0.000000e+00 : f32
    %14 = vector.broadcast %cst_9 : f32 to vector<64x128xf32>
    %15 = arith.maximumf %13, %14 : vector<64x128xf32>
    %c0_10 = arith.constant 0 : index
    %c0_11 = arith.constant 0 : index
    %16 = vector.load %arg5[%c0_10, %c0_11] : memref<32x64xbf16, #tpu.memory_space<vmem>>, vector<32x64xbf16>
    %17 = arith.truncf %15 : vector<64x128xf32> to vector<64x128xbf16>
    %cst_12 = arith.constant dense<0.000000e+00> : vector<32x128xf32>
    %18 = tpu.matmul %16, %17, %cst_12 {dimension_numbers = #tpu.dot_dimension_numbers<[1], [0], [0], [1], [0, 0, 1, 1], [], []>} : vector<32x64xbf16>, vector<64x128xbf16>, vector<32x128xf32> -> vector<32x128xf32>
    %c0_13 = arith.constant 0 : index
    %c0_14 = arith.constant 0 : index
    %19 = vector.load %arg6[%c0_13, %c0_14] : memref<32x1xf32, #tpu.memory_space<vmem>>, vector<32x1xf32>
    %20 = vector.broadcast %19 : vector<32x1xf32> to vector<32x128xf32>
    %21 = arith.addf %18, %20 : vector<32x128xf32>
    %cst_15 = arith.constant 0.000000e+00 : f32
    %22 = vector.broadcast %cst_15 : f32 to vector<32x128xf32>
    %23 = arith.maximumf %21, %22 : vector<32x128xf32>
    %c0_16 = arith.constant 0 : index
    %c0_17 = arith.constant 0 : index
    %24 = vector.load %arg7[%c0_16, %c0_17] : memref<32x1xf32, #tpu.memory_space<vmem>>, vector<32x1xf32>
    %25 = vector.broadcast %24 : vector<32x1xf32> to vector<32x128xf32>
    %26 = arith.mulf %23, %25 : vector<32x128xf32>
    %cst_18 = arith.constant dense<0.000000e+00> : vector<128xf32>
    %27 = vector.multi_reduction <add>, %26, %cst_18 [0] : vector<32x128xf32> to vector<128xf32>
    %28 = vector.shape_cast %27 : vector<128xf32> to vector<1x128xf32>
    %c0_19 = arith.constant 0 : index
    %c0_20 = arith.constant 0 : index
    %29 = vector.load %arg8[%c0_19, %c0_20] : memref<1x1xf32, #tpu.memory_space<vmem>>, vector<1x1xf32>
    %30 = vector.broadcast %29 : vector<1x1xf32> to vector<1x128xf32>
    %31 = arith.addf %28, %30 : vector<1x128xf32>
    %c0_21 = arith.constant 0 : index
    %c0_22 = arith.constant 0 : index
    %32 = vector.load %arg2[%c0_21, %c0_22] : memref<1x128xf32, #tpu.memory_space<vmem>>, vector<1x128xf32>
    %33 = arith.addf %32, %31 : vector<1x128xf32>
    %34 = arith.negf %33 : vector<1x128xf32>
    %35 = math.exp %34 : vector<1x128xf32>
    %cst_23 = arith.constant 1.000000e+00 : f32
    %36 = vector.broadcast %cst_23 : f32 to vector<1x128xf32>
    %37 = arith.addf %36, %35 : vector<1x128xf32>
    %38 = arith.divf %36, %37 : vector<1x128xf32>
    %c0_24 = arith.constant 0 : index
    %c0_25 = arith.constant 0 : index
    %39 = vector.load %arg9[%c0_24, %c0_25] : memref<1x128xf32, #tpu.memory_space<vmem>>, vector<1x128xf32>
    tpu.vector_store %arg9[%c0_24, %c0_25], %38 {strides = array<i32>} : memref<1x128xf32, #tpu.memory_space<vmem>>, vector<1x128xf32>,
    return
  }
  func.func @transform_0(%arg0: i32) -> (i32, i32, i32) {
    %c0_i32 = arith.constant 0 : i32
    %c0_i32_0 = arith.constant 0 : i32
    %c0_i32_1 = arith.constant 0 : i32
    return %c0_i32, %c0_i32_0, %arg0 : i32, i32, i32
  }
  func.func @transform_1(%arg0: i32) -> (i32, i32) {
    %c0_i32 = arith.constant 0 : i32
    %c0_i32_0 = arith.constant 0 : i32
    return %c0_i32, %arg0 : i32, i32
  }
  func.func @transform_2(%arg0: i32) -> (i32, i32) {
    %c0_i32 = arith.constant 0 : i32
    %c0_i32_0 = arith.constant 0 : i32
    %c0_i32_1 = arith.constant 0 : i32
    return %c0_i32, %c0_i32_0 : i32, i32
  }
  func.func @transform_3(%arg0: i32) -> (i32, i32) {
    %c0_i32 = arith.constant 0 : i32
    %c0_i32_0 = arith.constant 0 : i32
    %c0_i32_1 = arith.constant 0 : i32
    return %c0_i32, %c0_i32_0 : i32, i32
  }
  func.func @transform_4(%arg0: i32) -> (i32, i32) {
    %c0_i32 = arith.constant 0 : i32
    %c0_i32_0 = arith.constant 0 : i32
    %c0_i32_1 = arith.constant 0 : i32
    return %c0_i32, %c0_i32_0 : i32, i32
  }
  func.func @transform_5(%arg0: i32) -> (i32, i32) {
    %c0_i32 = arith.constant 0 : i32
    %c0_i32_0 = arith.constant 0 : i32
    %c0_i32_1 = arith.constant 0 : i32
    return %c0_i32, %c0_i32_0 : i32, i32
  }
  func.func @transform_6(%arg0: i32) -> (i32, i32) {
    %c0_i32 = arith.constant 0 : i32
    %c0_i32_0 = arith.constant 0 : i32
    %c0_i32_1 = arith.constant 0 : i32
    return %c0_i32, %c0_i32_0 : i32, i32
  }
  func.func @transform_7(%arg0: i32) -> (i32, i32) {
    %c0_i32 = arith.constant 0 : i32
    %c0_i32_0 = arith.constant 0 : i32
    %c0_i32_1 = arith.constant 0 : i32
    return %c0_i32, %c0_i32_0 : i32, i32
  }
  func.func @transform_8(%arg0: i32) -> (i32, i32) {
    %c0_i32 = arith.constant 0 : i32
    %c0_i32_0 = arith.constant 0 : i32
    return %c0_i32, %arg0 : i32, i32
  }
}

</mosaic_0001>

<llo_original>
// kernel: fwd.1
$region0: #{fwd.1}
  #allocation0 [shape = 'u32[]', space=smem, size = 0x4, offset = 0x4, fixed_abs, tag = 'smem constant byte address 0x4 - core index']
  #allocation1 [shape = 'u32[144,128]{1,0:T(1,128)}', space=vmem, size = 0x12000, scoped, tag = 'internal scratch']
  #allocation2 [shape = 'f32[1,1]{1,0:T(1,128)S(1)}', space=vmem, size = 0x200, scoped, tag = 'scoped memory for fwd.1']
  %s0 = inlined_call_operand.vmem [shape: f32[2,32,128], index: 0, kind: input, shape index: {}]
  %s1 = inlined_call_operand.vmem [shape: f32[1,128], index: 1, kind: input, shape index: {}]
  %s2 = inlined_call_operand.vmem [shape: bf16[64,32], index: 2, kind: input, shape index: {}]
  %s3 = inlined_call_operand.vmem [shape: f32[64,1], index: 3, kind: input, shape index: {}]
  %s4 = inlined_call_operand.vmem [shape: bf16[32,64], index: 4, kind: input, shape index: {}]
  %s5 = inlined_call_operand.vmem [shape: f32[32,1], index: 5, kind: input, shape index: {}]
  %s6 = inlined_call_operand.vmem [shape: f32[32,1], index: 6, kind: input, shape index: {}]
  %s7 = inlined_call_operand.<no memory space> [shape: f32[1,1], index: 7, kind: input, shape index: {}]
  %s8 = inlined_call_operand.vmem [shape: f32[1,128], index: 8, kind: output, shape index: {}]
  %s9 = sld [smem:[#allocation0]]
  $region42: #{fwd.1} parent=0
    _
  %s11 = ssub.s32 1, %s9
  %s12 = scalar_select 0, %s11, %s9
  %v13 = vstv %s7
  %14 = vst [vmem:[#allocation2] sm:$0x1] %v13
  // Predicated region
  $region2: #{fwd.1} parent=0 // pred_check
    _
  $region3: #{fwd.1} parent=0 // pred_check_branch
    %16 = sbr.rel (0) target = $region5
  $region4: #{fwd.1} parent=0 // pred_region
    _
  $region5: #{fwd.1} parent=0 // pred_fallthru
    _
  // Predicated region
  $region6: #{fwd.1} parent=0 // pred_check
    _
  $region7: #{fwd.1} parent=0 // pred_check_branch
    %18 = sbr.rel (0) target = $region9
  $region8: #{fwd.1} parent=0 // pred_region
    _
  $region9: #{fwd.1} parent=0 // pred_fallthru
    _
  // Predicated region
  $region10: #{fwd.1} parent=0 // pred_check
    _
  $region11: #{fwd.1} parent=0 // pred_check_branch
    %20 = sbr.rel (0) target = $region13
  $region12: #{fwd.1} parent=0 // pred_region
    _
  $region13: #{fwd.1} parent=0 // pred_fallthru
    _
  // Predicated region
  $region14: #{fwd.1} parent=0 // pred_check
    _
  $region15: #{fwd.1} parent=0 // pred_check_branch
    %22 = sbr.rel (0) target = $region17
  $region16: #{fwd.1} parent=0 // pred_region
    _
  $region17: #{fwd.1} parent=0 // pred_fallthru
    _
  // Predicated region
  $region18: #{fwd.1} parent=0 // pred_check
    _
  $region19: #{fwd.1} parent=0 // pred_check_branch
    %24 = sbr.rel (0) target = $region21
  $region20: #{fwd.1} parent=0 // pred_region
    _
  $region21: #{fwd.1} parent=0 // pred_fallthru
    _
  // Predicated region
  $region22: #{fwd.1} parent=0 // pred_check
    _
  $region23: #{fwd.1} parent=0 // pred_check_branch
    %26 = sbr.rel (0) target = $region25
  $region24: #{fwd.1} parent=0 // pred_region
    _
  $region25: #{fwd.1} parent=0 // pred_fallthru
    _
  // Predicated region
  $region26: #{fwd.1} parent=0 // pred_check
    _
  $region27: #{fwd.1} parent=0 // pred_check_branch
    %28 = sbr.rel (0) target = $region29
  $region28: #{fwd.1} parent=0 // pred_region
    _
  $region29: #{fwd.1} parent=0 // pred_fallthru
    _
  // Predicated region
  $region30: #{fwd.1} parent=0 // pred_check
    _
  $region31: #{fwd.1} parent=0 // pred_check_branch
    %30 = sbr.rel (0) target = $region33
  $region32: #{fwd.1} parent=0 // pred_region
    _
  $region33: #{fwd.1} parent=0 // pred_fallthru
    _
  %v32 = vld [vmem:[%s0] sm:$0xff]
  %v33 = vld [vmem:[%s0 + $0x8] sm:$0xff]
  %v34 = vld [vmem:[%s0 + $0x10] sm:$0xff]
  %v35 = vld [vmem:[%s0 + $0x18] sm:$0xff]
  %s36 = scalar_lea.vmem %s0, 32
  %v37 = vld [vmem:[%s36] sm:$0xff]
  %v38 = vld [vmem:[%s36 + $0x8] sm:$0xff]
  %v39 = vld [vmem:[%s36 + $0x10] sm:$0xff]
  %v40 = vld [vmem:[%s36 + $0x18] sm:$0xff]
  %v41 = vmul.f32 %v32, %v32
  %v42 = vmul.f32 %v33, %v33
  %v43 = vmul.f32 %v34, %v34
  %v44 = vmul.f32 %v35, %v35
  %v45 = vsub.f32 %v41, %v37
  %v46 = vsub.f32 %v42, %v38
  %v47 = vsub.f32 %v43, %v39
  %v48 = vsub.f32 %v44, %v40
  %v49 = vmul.f32 %v45, 0.5
  %v50 = vmul.f32 %v46, 0.5
  %v51 = vmul.f32 %v47, 0.5
  %v52 = vmul.f32 %v48, 0.5
  %v53 = vld [vmem:[%s2] sm:$0xf]
  %v54 = vld [vmem:[%s2 + $0x4] sm:$0xf]
  %v55 = vld [vmem:[%s2 + $0x8] sm:$0xf]
  %v56 = vld [vmem:[%s2 + $0xc] sm:$0xf]
  %v57 = vld [vmem:[%s2 + $0x10] sm:$0xf]
  %v58 = vld [vmem:[%s2 + $0x14] sm:$0xf]
  %v59 = vld [vmem:[%s2 + $0x18] sm:$0xf]
  %v60 = vld [vmem:[%s2 + $0x1c] sm:$0xf]
  %v61 = vpack.c.bf16 %v50, %v49
  %v62 = vpack.c.bf16 %v52, %v51
  %v63 = vld [vmem:[%s3] sm:$0xff]
  %v64 = vld [vmem:[%s3 + $0x8] sm:$0xff]
  %v65 = vld [vmem:[%s3 + $0x10] sm:$0xff]
  %v66 = vld [vmem:[%s3 + $0x18] sm:$0xff]
  %v67 = vld [vmem:[%s3 + $0x20] sm:$0xff]
  %v68 = vld [vmem:[%s3 + $0x28] sm:$0xff]
  %v69 = vld [vmem:[%s3 + $0x30] sm:$0xff]
  %v70 = vld [vmem:[%s3 + $0x38] sm:$0xff]
  %72 = vset.pattern.permute.xlu0 0
  %73 = vperm.xlu0 %72, %v63
  %v74 = vpop.permute.xlu0 %73
  %77 = vset.pattern.permute.xlu0 0
  %78 = vperm.xlu0 %77, %v64
  %v79 = vpop.permute.xlu0 %78
  %82 = vset.pattern.permute.xlu0 0
  %83 = vperm.xlu0 %82, %v65
  %v84 = vpop.permute.xlu0 %83
  %87 = vset.pattern.permute.xlu0 0
  %88 = vperm.xlu0 %87, %v66
  %v89 = vpop.permute.xlu0 %88
  %92 = vset.pattern.permute.xlu0 0
  %93 = vperm.xlu0 %92, %v67
  %v94 = vpop.permute.xlu0 %93
  %97 = vset.pattern.permute.xlu0 0
  %98 = vperm.xlu0 %97, %v68
  %v99 = vpop.permute.xlu0 %98
  %102 = vset.pattern.permute.xlu0 0
  %103 = vperm.xlu0 %102, %v69
  %v104 = vpop.permute.xlu0 %103
  %107 = vset.pattern.permute.xlu0 0
  %108 = vperm.xlu0 %107, %v70
  %v109 = vpop.permute.xlu0 %108
  %v119 = vunpack.c.l.b16 %v53
  %v120 = vunpack.c.l.b16 %v54
  %v121 = vunpack.c.l.b16 %v55
  %v122 = vunpack.c.l.b16 %v56
  %v123 = vunpack.c.l.b16 %v57
  %v124 = vunpack.c.l.b16 %v58
  %v125 = vunpack.c.l.b16 %v59
  %v126 = vunpack.c.l.b16 %v60
  %v127 = vpack.c.b16 %v120, %v119
  %v128 = vpack.c.b16 %v122, %v121
  %v129 = vpack.c.b16 %v124, %v123
  %v130 = vpack.c.b16 %v126, %v125
  %vm131 = vcmask 261120
  %v133 = vsel %vm131, %v127, 0
  %v136 = vsel %vm131, %v128, 0
  %v139 = vsel %vm131, %v129, 0
  %v142 = vsel %vm131, %v130, 0
  %144 = vmatprep.subr.bf16.mxu0 0
  %145 = vmatpush1.bf16.msra.mxu0 %v61
  %146 = vmatprep.subr.bf16.mxu0 0
  %147 = vmatpush1.bf16.msra.mxu0 %v62
  %148 = vmatprep.subr.bf16.mxu0 0
  %149 = vmatpush1.bf16.msra.mxu0 0
  %150 = vmatprep.subr.bf16.mxu0 0
  %151 = vmatpush1.bf16.msra.mxu0 0
  %152 = vmatprep.subr.bf16.mxu0 0
  %153 = vmatpush1.bf16.msra.mxu0 0
  %154 = vmatprep.subr.bf16.mxu0 0
  %155 = vmatpush1.bf16.msra.mxu0 0
  %156 = vmatprep.subr.bf16.mxu0 0
  %157 = vmatpush1.bf16.msra.mxu0 0
  %158 = vmatprep.subr.bf16.mxu0 0
  %159 = vmatpush1.bf16.msra.mxu0 0
  %160 = vmatprep.subr.bf16.mxu0 0
  %161 = vmatpush1.bf16.msra.mxu0 0
  %162 = vmatprep.subr.bf16.mxu0 0
  %163 = vmatpush1.bf16.msra.mxu0 0
  %164 = vmatprep.subr.bf16.mxu0 0
  %165 = vmatpush1.bf16.msra.mxu0 0
  %166 = vmatprep.subr.bf16.mxu0 0
  %167 = vmatpush1.bf16.msra.mxu0 0
  %168 = vmatprep.subr.bf16.mxu0 0
  %169 = vmatpush1.bf16.msra.mxu0 0
  %170 = vmatprep.subr.bf16.mxu0 0
  %171 = vmatpush1.bf16.msra.mxu0 0
  %172 = vmatprep.subr.bf16.mxu0 0
  %173 = vmatpush1.bf16.msra.mxu0 0
  %174 = vmatprep.subr.bf16.mxu0 0
  %175 = vmatpush1.bf16.msra.mxu0 0
  %176 = vmatprep.mubr.bf16.mxu0 0
  %177 = vmatmul.mubr.bf16.gmra.mrb[0].mxu0 %v133
  %v178 = vpop.f32.mrb[0].mxu0
  %v179 = vadd.f32 %v74, %v178
  %v180 = vpop.f32.mrb[0].mxu0
  %v181 = vpop.f32.mrb[0].mxu0
  %v182 = vadd.f32 %v79, %v181
  %v183 = vpop.f32.mrb[0].mxu0
  %184 = vmatprep.mubr.bf16.mxu0 0
  %185 = vmatmul.mubr.bf16.gmra.mrb[0].mxu0 %v136
  %v186 = vpop.f32.mrb[0].mxu0
  %v187 = vadd.f32 %v84, %v186
  %v188 = vpop.f32.mrb[0].mxu0
  %v189 = vpop.f32.mrb[0].mxu0
  %v190 = vadd.f32 %v89, %v189
  %v191 = vpop.f32.mrb[0].mxu0
  %192 = vmatprep.mubr.bf16.mxu0 0
  %193 = vmatmul.mubr.bf16.gmra.mrb[0].mxu0 %v139
  %v194 = vpop.f32.mrb[0].mxu0
  %v195 = vadd.f32 %v94, %v194
  %v196 = vpop.f32.mrb[0].mxu0
  %v197 = vpop.f32.mrb[0].mxu0
  %v198 = vadd.f32 %v99, %v197
  %v199 = vpop.f32.mrb[0].mxu0
  %200 = vmatprep.mubr.bf16.mxu0 0
  %201 = vmatmul.mubr.bf16.gmra.mrb[0].mxu0 %v142
  %v202 = vpop.f32.mrb[0].mxu0
  %v203 = vadd.f32 %v104, %v202
  %v204 = vpop.f32.mrb[0].mxu0
  %v205 = vpop.f32.mrb[0].mxu0
  %v206 = vadd.f32 %v109, %v205
  %v207 = vpop.f32.mrb[0].mxu0
  %208 = vdwg.mxu0
  %v209 = vmax.f32 %v179, 0.0
  %v210 = vmax.f32 %v182, 0.0
  %v211 = vmax.f32 %v187, 0.0
  %v212 = vmax.f32 %v190, 0.0
  %v213 = vmax.f32 %v195, 0.0
  %v214 = vmax.f32 %v198, 0.0
  %v215 = vmax.f32 %v203, 0.0
  %v216 = vmax.f32 %v206, 0.0
  %v217 = vld [vmem:[%s4] sm:$0xf]
  %v218 = vld [vmem:[%s4 + $0x4] sm:$0xf]
  %v219 = vld [vmem:[%s4 + $0x8] sm:$0xf]
  %v220 = vld [vmem:[%s4 + $0xc] sm:$0xf]
  %v221 = vpack.c.bf16 %v210, %v209
  %v222 = vpack.c.bf16 %v212, %v211
  %v223 = vpack.c.bf16 %v214, %v213
  %v224 = vpack.c.bf16 %v216, %v215
  %v225 = vld [vmem:[%s5] sm:$0xff]
  %v226 = vld [vmem:[%s5 + $0x8] sm:$0xff]
  %v227 = vld [vmem:[%s5 + $0x10] sm:$0xff]
  %v228 = vld [vmem:[%s5 + $0x18] sm:$0xff]
  %230 = vset.pattern.permute.xlu0 0
  %231 = vperm.xlu0 %230, %v225
  %v232 = vpop.permute.xlu0 %231
  %235 = vset.pattern.permute.xlu0 0
  %236 = vperm.xlu0 %235, %v226
  %v237 = vpop.permute.xlu0 %236
  %240 = vset.pattern.permute.xlu0 0
  %241 = vperm.xlu0 %240, %v227
  %v242 = vpop.permute.xlu0 %241
  %245 = vset.pattern.permute.xlu0 0
  %246 = vperm.xlu0 %245, %v228
  %v247 = vpop.permute.xlu0 %246
  %v253 = vunpack.c.l.b16 %v217
  %v254 = vunpack.c.l.b16 %v218
  %v255 = vunpack.c.l.b16 %v219
  %v256 = vunpack.c.l.b16 %v220
  %v257 = vpack.c.b16 %v254, %v253
  %v258 = vpack.c.b16 %v256, %v255
  %vm259 = vcmask 523264
  %v261 = vsel %vm259, %v257, 0
  %v264 = vsel %vm259, %v258, 0
  %266 = vmatprep.subr.bf16.mxu0 0
  %267 = vmatpush1.bf16.msra.mxu0 %v221
  %268 = vmatprep.subr.bf16.mxu0 0
  %269 = vmatpush1.bf16.msra.mxu0 %v222
  %270 = vmatprep.subr.bf16.mxu0 0
  %271 = vmatpush1.bf16.msra.mxu0 %v223
  %272 = vmatprep.subr.bf16.mxu0 0
  %273 = vmatpush1.bf16.msra.mxu0 %v224
  %274 = vmatprep.subr.bf16.mxu0 0
  %275 = vmatpush1.bf16.msra.mxu0 0
  %276 = vmatprep.subr.bf16.mxu0 0
  %277 = vmatpush1.bf16.msra.mxu0 0
  %278 = vmatprep.subr.bf16.mxu0 0
  %279 = vmatpush1.bf16.msra.mxu0 0
  %280 = vmatprep.subr.bf16.mxu0 0
  %281 = vmatpush1.bf16.msra.mxu0 0
  %282 = vmatprep.subr.bf16.mxu0 0
  %283 = vmatpush1.bf16.msra.mxu0 0
  %284 = vmatprep.subr.bf16.mxu0 0
  %285 = vmatpush1.bf16.msra.mxu0 0
  %286 = vmatprep.subr.bf16.mxu0 0
  %287 = vmatpush1.bf16.msra.mxu0 0
  %288 = vmatprep.subr.bf16.mxu0 0
  %289 = vmatpush1.bf16.msra.mxu0 0
  %290 = vmatprep.subr.bf16.mxu0 0
  %291 = vmatpush1.bf16.msra.mxu0 0
  %292 = vmatprep.subr.bf16.mxu0 0
  %293 = vmatpush1.bf16.msra.mxu0 0
  %294 = vmatprep.subr.bf16.mxu0 0
  %295 = vmatpush1.bf16.msra.mxu0 0
  %296 = vmatprep.subr.bf16.mxu0 0
  %297 = vmatpush1.bf16.msra.mxu0 0
  %298 = vmatprep.mubr.bf16.mxu0 0
  %299 = vmatmul.mubr.bf16.gmra.mrb[0].mxu0 %v261
  %v300 = vpop.f32.mrb[0].mxu0
  %v301 = vadd.f32 %v232, %v300
  %v302 = vpop.f32.mrb[0].mxu0
  %v303 = vpop.f32.mrb[0].mxu0
  %v304 = vadd.f32 %v237, %v303
  %v305 = vpop.f32.mrb[0].mxu0
  %306 = vmatprep.mubr.bf16.mxu0 0
  %307 = vmatmul.mubr.bf16.gmra.mrb[0].mxu0 %v264
  %v308 = vpop.f32.mrb[0].mxu0
  %v309 = vadd.f32 %v242, %v308
  %v310 = vpop.f32.mrb[0].mxu0
  %v311 = vpop.f32.mrb[0].mxu0
  %v312 = vadd.f32 %v247, %v311
  %v313 = vpop.f32.mrb[0].mxu0
  %314 = vdwg.mxu0
  %v315 = vmax.f32 %v301, 0.0
  %v316 = vmax.f32 %v304, 0.0
  %v317 = vmax.f32 %v309, 0.0
  %v318 = vmax.f32 %v312, 0.0
  %v319 = vld [vmem:[%s6] sm:$0xff]
  %v320 = vld [vmem:[%s6 + $0x8] sm:$0xff]
  %v321 = vld [vmem:[%s6 + $0x10] sm:$0xff]
  %v322 = vld [vmem:[%s6 + $0x18] sm:$0xff]
  %324 = vset.pattern.permute.xlu0 0
  %325 = vperm.xlu0 %324, %v319
  %v326 = vpop.permute.xlu0 %325
  %329 = vset.pattern.permute.xlu0 0
  %330 = vperm.xlu0 %329, %v320
  %v331 = vpop.permute.xlu0 %330
  %334 = vset.pattern.permute.xlu0 0
  %335 = vperm.xlu0 %334, %v321
  %v336 = vpop.permute.xlu0 %335
  %339 = vset.pattern.permute.xlu0 0
  %340 = vperm.xlu0 %339, %v322
  %v341 = vpop.permute.xlu0 %340
  %v343 = vmul.f32 %v315, %v326
  %v344 = vmul.f32 %v316, %v331
  %v345 = vmul.f32 %v317, %v336
  %v346 = vmul.f32 %v318, %v341
  %v347 = vadd.f32 %v343, %v344
  %v348 = vadd.f32 %v347, %v345
  %v349 = vadd.f32 %v348, %v346
  %v350 = vrot.slane %v349, 4
  %v351 = vadd.f32 %v349, %v350
  %v352 = vrot.slane %v351, 2
  %v353 = vadd.f32 %v351, %v352
  %v354 = vrot.slane %v353, 1
  %v355 = vadd.f32 %v353, %v354
  %v356 = vld [vmem:[#allocation2] sm:$0x1]
  %358 = vset.pattern.permute.xlu0 0
  %359 = vperm.xlu0 %358, %v356
  %v360 = vpop.permute.xlu0 %359
  %v362 = vlaneseq
  %v363 = vshrl.u32 %v362, 7
  %v364 = vsub.s32 0, %v363
  %v365 = vrot.slane %v360, %v364
  %v366 = vadd.f32 %v355, %v365
  %v367 = vld [vmem:[%s1] sm:$0x1]
  %v368 = vadd.f32 %v367, %v366
  %v369 = vxor.u32 %v368, 2147483648
  %v370 = vmul.f32 %v369, 1.442695
  %v371 = vpow.pop %v370
  %v372 = vadd.f32 %v371, 1.0
  %v373 = vrcp.pop %v372
  %v374 = vmul.f32 1.0, %v373
  %375 = vst [vmem:[%s8] sm:$0x1] %v374
  // Predicated region
  $region34: #{fwd.1} parent=0 // pred_check
    _
  $region35: #{fwd.1} parent=0 // pred_check_branch
    %377 = sbr.rel (0) target = $region37
  $region36: #{fwd.1} parent=0 // pred_region
    _
  $region37: #{fwd.1} parent=0 // pred_fallthru
    _
  // Predicated region
  $region38: #{fwd.1} parent=0 // pred_check
    _
  $region39: #{fwd.1} parent=0 // pred_check_branch
    %379 = sbr.rel (0) target = $region41
  $region40: #{fwd.1} parent=0 // pred_region
    _
  $region41: #{fwd.1} parent=0 // pred_fallthru
    _

</llo_original>
